<compile_context>
chip_gen: v5e
topology: v5e:2x2
jax: 0.10.0
libtpu: 0.0.40
codegen_flags: <defaults>
</compile_context>

<pallas_src>
import functools

import jax
import jax.numpy as jnp
from jax.experimental import pallas as pl
from jax.experimental.pallas import tpu as pltpu

BN_EPS = 1e-5
NORM_EPS = 1e-12
P_DROP = 0.5


def memory_bank_kernel(feat_ref, wT_ref, b_ref, g1_ref, be1_ref, g2_ref,
                       be2_ref, keep_ref, x_out_ref, emb_out_ref, acc_ref,
                       *, hw_total):
    k = pl.program_id(0)

    @pl.when(k == 0)
    def _init():
        acc_ref[...] = jnp.zeros_like(acc_ref)

    # ---- per-step work: partial spatial sum for the GAP (hides under DMA) ----
    acc_ref[...] += jnp.sum(feat_ref[...].astype(jnp.float32), axis=1)

    @pl.when(k == pl.num_programs(0) - 1)
    def _finalize():
        # gap(...).squeeze()
        x = acc_ref[...] * (1.0 / hw_total)                       # (N, C) f32
        x_out_ref[...] = x.astype(x_out_ref.dtype)

        # bottleneck = BatchNorm1d(out_dim), training: biased batch stats
        mu1 = jnp.mean(x, axis=0, keepdims=True)
        var1 = jnp.mean(jnp.square(x - mu1), axis=0, keepdims=True)
        bn = (x - mu1) * jax.lax.rsqrt(var1 + BN_EPS)
        bn = bn * g1_ref[...] + be1_ref[...]

        # embeding_memo: Linear(out_dim -> E) on the MXU (f32 accumulation).
        w = wT_ref[...]
        emb = jnp.dot(bn.astype(w.dtype), w, preferred_element_type=jnp.float32)
        emb = emb + b_ref[...].astype(jnp.float32)

        # embeding_memo_bn = BatchNorm1d(E), training: biased batch stats
        mu2 = jnp.mean(emb, axis=0, keepdims=True)
        var2 = jnp.mean(jnp.square(emb - mu2), axis=0, keepdims=True)
        emb = (emb - mu2) * jax.lax.rsqrt(var2 + BN_EPS)
        emb = emb * g2_ref[...] + be2_ref[...]

        # F.normalize(p=2, dim=1):  x / max(||x||, eps) == x * rsqrt(max(s, eps^2))
        s = jnp.sum(emb * emb, axis=1, keepdims=True)
        emb = emb * jax.lax.rsqrt(jnp.maximum(s, NORM_EPS * NORM_EPS))

        # Dropout(p=0.5), training mode (inverted dropout), host-supplied mask.
        emb = emb * keep_ref[...] * (1.0 / (1.0 - P_DROP))

        emb_out_ref[...] = emb.astype(emb_out_ref.dtype)


def _pick_t_hw(n, hw, c, itemsize, target_bytes=8 * 1024 * 1024):
    """Largest divisor of HW (preferring multiples of 8) whose (N, T_HW, C)
    block stays within ~target_bytes (keeps the DMA stream near roofline
    without blowing scoped VMEM)."""
    divisors = [d for d in range(1, hw + 1) if hw % d == 0]
    fitting = [d for d in divisors if n * d * c * itemsize <= target_bytes]
    if not fitting:
        return 1
    mult8 = [d for d in fitting if d % 8 == 0]
    return max(mult8) if mult8 else max(fitting)


@functools.partial(jax.jit, static_argnames=("t_hw",))
def memory_bank_forward(feat, wT, b, g1, be1, g2, be2, keep_mask, t_hw=None):
    """feat: (N, HW, C) backbone feature map (f32 or bf16).
    Returns (x, embed_feat) of the training-mode forward."""
    n, hw, c = feat.shape
    e = wT.shape[1]
    feat_itemsize = jnp.dtype(feat.dtype).itemsize
    if t_hw is None:
        t_hw = _pick_t_hw(n, hw, c, feat_itemsize)
    assert hw % t_hw == 0, "t_hw must divide HW"
    steps = hw // t_hw

    feat_block_bytes = n * t_hw * c * feat_itemsize
    param_bytes = sum(int(a.size) * jnp.dtype(a.dtype).itemsize
                      for a in (wT, b, g1, be1, g2, be2, keep_mask))
    out_bytes = (n * c + n * e) * 4
    # 2x feat block (double buffer) + resident params/outputs + acc + headroom.
    vmem_limit = int(min(64 * 1024 * 1024,
                         max(16 * 1024 * 1024,
                             2 * feat_block_bytes + 2 * param_bytes
                             + 2 * out_bytes + n * c * 4 + (4 << 20))))

    kernel = functools.partial(memory_bank_kernel, hw_total=hw)
    resident = lambda i: (0, 0)  # params / outputs stay resident across the grid

    return pl.pallas_call(
        kernel,
        grid=(steps,),
        in_specs=[
            pl.BlockSpec((n, t_hw, c), lambda i: (0, i, 0)),  # streamed features
            pl.BlockSpec((c, e), resident),                   # W^T
            pl.BlockSpec((1, e), resident),                   # linear bias
            pl.BlockSpec((1, c), resident),                   # bottleneck gamma
            pl.BlockSpec((1, c), resident),                   # bottleneck beta
            pl.BlockSpec((1, e), resident),                   # emb-bn gamma
            pl.BlockSpec((1, e), resident),                   # emb-bn beta
            pl.BlockSpec((n, e), resident),                   # dropout keep mask
        ],
        out_specs=(
            pl.BlockSpec((n, c), resident),
            pl.BlockSpec((n, e), resident),
        ),
        out_shape=(
            jax.ShapeDtypeStruct((n, c), jnp.float32),
            jax.ShapeDtypeStruct((n, e), jnp.float32),
        ),
        scratch_shapes=[pltpu.VMEM((n, c), jnp.float32)],     # GAP accumulator
        compiler_params=pltpu.CompilerParams(
            dimension_semantics=("arbitrary",),               # reduction axis
            vmem_limit_bytes=vmem_limit,
        ),
        cost_estimate=pl.CostEstimate(
            flops=2 * n * c * e,
            transcendentals=n * e + n * c,
            bytes_accessed=int(feat.size) * feat_itemsize + param_bytes + out_bytes,
        ),
    )(feat, wT, b, g1, be1, g2, be2, keep_mask)


if __name__ == "__main__":
    # Small shapes consistent with the module's forward:
    #   backbone features (N, C=out_dim, H, W) -> here (N, HW, C)
    N, H, W = 8, 4, 4
    OUT_DIM = 256          # stands in for 2048 (resnet50 feature dim)
    EMB = 128              # stands in for embeding_fea_size=2048

    key = jax.random.PRNGKey(0)
    k_feat, k_w, k_drop = jax.random.split(key, 3)

    feat_f32 = jax.random.normal(k_feat, (N, H * W, OUT_DIM), dtype=jnp.float32)
    feat = feat_f32.astype(jnp.bfloat16)   # stream features as bf16 (HBM-bound)

    # Deterministic parameter init mirroring __init__:
    #   embeding_memo: kaiming_normal_(mode='fan_out') -> std = sqrt(2 / E), bias 0
    #   bottleneck BN / embeding_memo_bn: weight = 1, bias = 0
    wT = jax.random.normal(k_w, (OUT_DIM, EMB), dtype=jnp.float32) * jnp.sqrt(2.0 / EMB)
    b = jnp.zeros((1, EMB), dtype=jnp.float32)
    g1 = jnp.ones((1, OUT_DIM), dtype=jnp.float32)
    be1 = jnp.zeros((1, OUT_DIM), dtype=jnp.float32)
    g2 = jnp.ones((1, EMB), dtype=jnp.float32)
    be2 = jnp.zeros((1, EMB), dtype=jnp.float32)

    # Dropout keep-mask (training, p=0.5), host-side RNG.
    keep = jax.random.bernoulli(k_drop, 1.0 - P_DROP, (N, EMB)).astype(jnp.float32)

    x_out, emb_out = memory_bank_forward(feat, wT, b, g1, be1, g2, be2, keep,
                                         t_hw=8)   # -> 2 streamed HW tiles
    jax.block_until_ready((x_out, emb_out))

    # Pure-JAX reference of the same head on the same (bf16-quantized) features.
    xf = feat.astype(jnp.float32)
    x_ref = jnp.mean(xf, axis=1)
    mu1 = x_ref.mean(0)
    var1 = jnp.mean((x_ref - mu1) ** 2, axis=0)
    bn_ref = (x_ref - mu1) / jnp.sqrt(var1 + BN_EPS) * g1[0] + be1[0]
    emb_ref = jnp.dot(bn_ref, wT, precision=jax.lax.Precision.HIGHEST) + b[0]
    mu2 = emb_ref.mean(0)
    var2 = jnp.mean((emb_ref - mu2) ** 2, axis=0)
    emb_ref = (emb_ref - mu2) / jnp.sqrt(var2 + BN_EPS) * g2[0] + be2[0]
    nrm = jnp.sqrt(jnp.sum(emb_ref ** 2, axis=1, keepdims=True))
    emb_ref = emb_ref / jnp.maximum(nrm, NORM_EPS)
    emb_ref = emb_ref * keep / (1.0 - P_DROP)

    assert x_out.shape == (N, OUT_DIM) and emb_out.shape == (N, EMB)
    assert jnp.allclose(x_out, x_ref, atol=1e-4, rtol=1e-4)
    assert jnp.allclose(emb_out, emb_ref, atol=2e-2, rtol=2e-2)
    assert bool(jnp.all(jnp.isfinite(emb_out)))

    print("KERNEL_OK")
</pallas_src>

<mosaic_0001>
module attributes {stable_mosaic.version = 11 : i64} {
  func.func @memory_bank_kernel(%arg0: i32, %arg1: memref<8x8x256xbf16, #tpu.memory_space<vmem>>, %arg2: memref<256x128xf32, #tpu.memory_space<vmem>>, %arg3: memref<1x128xf32, #tpu.memory_space<vmem>>, %arg4: memref<1x256xf32, #tpu.memory_space<vmem>>, %arg5: memref<1x256xf32, #tpu.memory_space<vmem>>, %arg6: memref<1x128xf32, #tpu.memory_space<vmem>>, %arg7: memref<1x128xf32, #tpu.memory_space<vmem>>, %arg8: memref<8x128xf32, #tpu.memory_space<vmem>>, %arg9: memref<8x256xf32, #tpu.memory_space<vmem>>, %arg10: memref<8x128xf32, #tpu.memory_space<vmem>>, %arg11: memref<8x256xf32, #tpu.memory_space<vmem>>) attributes {dimension_semantics = [#tpu.dimension_semantics<arbitrary>], iteration_bounds = array<i64: 2>, scalar_prefetch = 0 : i64, scratch_operands = 1 : i64, tpu.core_type = #tpu.core_type<tc>, window_params = [{transform_indices = @transform_0, window_bounds = array<i64: 8, 8, 256>}, {pipeline_mode = #tpu.pipeline_mode<synchronous>, transform_indices = @transform_1, window_bounds = array<i64: 256, 128>}, {pipeline_mode = #tpu.pipeline_mode<synchronous>, transform_indices = @transform_2, window_bounds = array<i64: 1, 128>}, {pipeline_mode = #tpu.pipeline_mode<synchronous>, transform_indices = @transform_3, window_bounds = array<i64: 1, 256>}, {pipeline_mode = #tpu.pipeline_mode<synchronous>, transform_indices = @transform_4, window_bounds = array<i64: 1, 256>}, {pipeline_mode = #tpu.pipeline_mode<synchronous>, transform_indices = @transform_5, window_bounds = array<i64: 1, 128>}, {pipeline_mode = #tpu.pipeline_mode<synchronous>, transform_indices = @transform_6, window_bounds = array<i64: 1, 128>}, {pipeline_mode = #tpu.pipeline_mode<synchronous>, transform_indices = @transform_7, window_bounds = array<i64: 8, 128>}, {pipeline_mode = #tpu.pipeline_mode<synchronous>, transform_indices = @transform_8, window_bounds = array<i64: 8, 256>}, {pipeline_mode = #tpu.pipeline_mode<synchronous>, transform_indices = @transform_9, window_bounds = array<i64: 8, 128>}]} {
    %c0_i32 = arith.constant 0 : i32
    %0 = arith.cmpi eq, %arg0, %c0_i32 : i32
    %1 = arith.extui %0 : i1 to i32
    %c0_i32_0 = arith.constant 0 : i32
    %2 = arith.cmpi ne, %1, %c0_i32_0 : i32
    scf.if %2 {
      %cst_8 = arith.constant 0.000000e+00 : f32
      %12 = vector.broadcast %cst_8 : f32 to vector<8x256xf32>
      %c0_9 = arith.constant 0 : index
      %c0_10 = arith.constant 0 : index
      %13 = vector.load %arg11[%c0_9, %c0_10] : memref<8x256xf32, #tpu.memory_space<vmem>>, vector<8x256xf32>
      tpu.vector_store %arg11[%c0_9, %c0_10], %12 {strides = array<i32>} : memref<8x256xf32, #tpu.memory_space<vmem>>, vector<8x256xf32>,
    } else {
    }
    %c0 = arith.constant 0 : index
    %c0_1 = arith.constant 0 : index
    %3 = vector.load %arg11[%c0, %c0_1] : memref<8x256xf32, #tpu.memory_space<vmem>>, vector<8x256xf32>
    %c0_2 = arith.constant 0 : index
    %c0_3 = arith.constant 0 : index
    %c0_4 = arith.constant 0 : index
    %4 = vector.load %arg1[%c0_2, %c0_3, %c0_4] : memref<8x8x256xbf16, #tpu.memory_space<vmem>>, vector<8x8x256xbf16>
    %5 = arith.extf %4 : vector<8x8x256xbf16> to vector<8x8x256xf32>
    %cst = arith.constant dense<0.000000e+00> : vector<8x256xf32>
    %6 = vector.multi_reduction <add>, %5, %cst [1] : vector<8x8x256xf32> to vector<8x256xf32>
    %7 = arith.addf %3, %6 : vector<8x256xf32>
    %c0_5 = arith.constant 0 : index
    %c0_6 = arith.constant 0 : index
    %8 = vector.load %arg11[%c0_5, %c0_6] : memref<8x256xf32, #tpu.memory_space<vmem>>, vector<8x256xf32>
    tpu.vector_store %arg11[%c0_5, %c0_6], %7 {strides = array<i32>} : memref<8x256xf32, #tpu.memory_space<vmem>>, vector<8x256xf32>,
    %c1_i32 = arith.constant 1 : i32
    %9 = arith.cmpi eq, %arg0, %c1_i32 : i32
    %10 = arith.extui %9 : i1 to i32
    %c0_i32_7 = arith.constant 0 : i32
    %11 = arith.cmpi ne, %10, %c0_i32_7 : i32
    scf.if %11 {
      %c0_8 = arith.constant 0 : index
      %c0_9 = arith.constant 0 : index
      %12 = vector.load %arg11[%c0_8, %c0_9] : memref<8x256xf32, #tpu.memory_space<vmem>>, vector<8x256xf32>
      %cst_10 = arith.constant 6.250000e-02 : f32
      %13 = vector.broadcast %cst_10 : f32 to vector<8x256xf32>
      %14 = arith.mulf %12, %13 : vector<8x256xf32>
      %c0_11 = arith.constant 0 : index
      %c0_12 = arith.constant 0 : index
      %15 = vector.load %arg9[%c0_11, %c0_12] : memref<8x256xf32, #tpu.memory_space<vmem>>, vector<8x256xf32>
      tpu.vector_store %arg9[%c0_11, %c0_12], %14 {strides = array<i32>} : memref<8x256xf32, #tpu.memory_space<vmem>>, vector<8x256xf32>,
      %cst_13 = arith.constant dense<0.000000e+00> : vector<256xf32>
      %16 = vector.multi_reduction <add>, %14, %cst_13 [0] : vector<8x256xf32> to vector<256xf32>
      %17 = vector.shape_cast %16 : vector<256xf32> to vector<1x256xf32>
      %cst_14 = arith.constant 8.000000e+00 : f32
      %18 = vector.broadcast %cst_14 : f32 to vector<1x256xf32>
      %19 = arith.divf %17, %18 : vector<1x256xf32>
      %20 = vector.broadcast %19 : vector<1x256xf32> to vector<8x256xf32>
      %21 = arith.subf %14, %20 : vector<8x256xf32>
      %22 = arith.mulf %21, %21 : vector<8x256xf32>
      %cst_15 = arith.constant dense<0.000000e+00> : vector<256xf32>
      %23 = vector.multi_reduction <add>, %22, %cst_15 [0] : vector<8x256xf32> to vector<256xf32>
      %24 = vector.shape_cast %23 : vector<256xf32> to vector<1x256xf32>
      %cst_16 = arith.constant 8.000000e+00 : f32
      %25 = vector.broadcast %cst_16 : f32 to vector<1x256xf32>
      %26 = arith.divf %24, %25 : vector<1x256xf32>
      %27 = vector.broadcast %19 : vector<1x256xf32> to vector<8x256xf32>
      %28 = arith.subf %14, %27 : vector<8x256xf32>
      %cst_17 = arith.constant 9.99999974E-6 : f32
      %29 = vector.broadcast %cst_17 : f32 to vector<1x256xf32>
      %30 = arith.addf %26, %29 : vector<1x256xf32>
      %31 = math.rsqrt %30 : vector<1x256xf32>
      %32 = vector.broadcast %31 : vector<1x256xf32> to vector<8x256xf32>
      %33 = arith.mulf %28, %32 : vector<8x256xf32>
      %c0_18 = arith.constant 0 : index
      %c0_19 = arith.constant 0 : index
      %34 = vector.load %arg4[%c0_18, %c0_19] : memref<1x256xf32, #tpu.memory_space<vmem>>, vector<1x256xf32>
      %35 = vector.broadcast %34 : vector<1x256xf32> to vector<8x256xf32>
      %36 = arith.mulf %33, %35 : vector<8x256xf32>
      %c0_20 = arith.constant 0 : index
      %c0_21 = arith.constant 0 : index
      %37 = vector.load %arg5[%c0_20, %c0_21] : memref<1x256xf32, #tpu.memory_space<vmem>>, vector<1x256xf32>
      %38 = vector.broadcast %37 : vector<1x256xf32> to vector<8x256xf32>
      %39 = arith.addf %36, %38 : vector<8x256xf32>
      %c0_22 = arith.constant 0 : index
      %c0_23 = arith.constant 0 : index
      %40 = vector.load %arg2[%c0_22, %c0_23] : memref<256x128xf32, #tpu.memory_space<vmem>>, vector<256x128xf32>
      %cst_24 = arith.constant dense<0.000000e+00> : vector<8x128xf32>
      %41 = tpu.matmul %39, %40, %cst_24 {dimension_numbers = #tpu.dot_dimension_numbers<[1], [0], [0], [1], [0, 0, 1, 1], [], []>} : vector<8x256xf32>, vector<256x128xf32>, vector<8x128xf32> -> vector<8x128xf32>
      %c0_25 = arith.constant 0 : index
      %c0_26 = arith.constant 0 : index
      %42 = vector.load %arg3[%c0_25, %c0_26] : memref<1x128xf32, #tpu.memory_space<vmem>>, vector<1x128xf32>
      %43 = vector.broadcast %42 : vector<1x128xf32> to vector<8x128xf32>
      %44 = arith.addf %41, %43 : vector<8x128xf32>
      %cst_27 = arith.constant dense<0.000000e+00> : vector<128xf32>
      %45 = vector.multi_reduction <add>, %44, %cst_27 [0] : vector<8x128xf32> to vector<128xf32>
      %46 = vector.shape_cast %45 : vector<128xf32> to vector<1x128xf32>
      %cst_28 = arith.constant 8.000000e+00 : f32
      %47 = vector.broadcast %cst_28 : f32 to vector<1x128xf32>
      %48 = arith.divf %46, %47 : vector<1x128xf32>
      %49 = vector.broadcast %48 : vector<1x128xf32> to vector<8x128xf32>
      %50 = arith.subf %44, %49 : vector<8x128xf32>
      %51 = arith.mulf %50, %50 : vector<8x128xf32>
      %cst_29 = arith.constant dense<0.000000e+00> : vector<128xf32>
      %52 = vector.multi_reduction <add>, %51, %cst_29 [0] : vector<8x128xf32> to vector<128xf32>
      %53 = vector.shape_cast %52 : vector<128xf32> to vector<1x128xf32>
      %cst_30 = arith.constant 8.000000e+00 : f32
      %54 = vector.broadcast %cst_30 : f32 to vector<1x128xf32>
      %55 = arith.divf %53, %54 : vector<1x128xf32>
      %56 = vector.broadcast %48 : vector<1x128xf32> to vector<8x128xf32>
      %57 = arith.subf %44, %56 : vector<8x128xf32>
      %cst_31 = arith.constant 9.99999974E-6 : f32
      %58 = vector.broadcast %cst_31 : f32 to vector<1x128xf32>
      %59 = arith.addf %55, %58 : vector<1x128xf32>
      %60 = math.rsqrt %59 : vector<1x128xf32>
      %61 = vector.broadcast %60 : vector<1x128xf32> to vector<8x128xf32>
      %62 = arith.mulf %57, %61 : vector<8x128xf32>
      %c0_32 = arith.constant 0 : index
      %c0_33 = arith.constant 0 : index
      %63 = vector.load %arg6[%c0_32, %c0_33] : memref<1x128xf32, #tpu.memory_space<vmem>>, vector<1x128xf32>
      %64 = vector.broadcast %63 : vector<1x128xf32> to vector<8x128xf32>
      %65 = arith.mulf %62, %64 : vector<8x128xf32>
      %c0_34 = arith.constant 0 : index
      %c0_35 = arith.constant 0 : index
      %66 = vector.load %arg7[%c0_34, %c0_35] : memref<1x128xf32, #tpu.memory_space<vmem>>, vector<1x128xf32>
      %67 = vector.broadcast %66 : vector<1x128xf32> to vector<8x128xf32>
      %68 = arith.addf %65, %67 : vector<8x128xf32>
      %69 = arith.mulf %68, %68 : vector<8x128xf32>
      %cst_36 = arith.constant dense<0.000000e+00> : vector<8xf32>
      %70 = vector.multi_reduction <add>, %69, %cst_36 [1] : vector<8x128xf32> to vector<8xf32>
      %71 = vector.shape_cast %70 : vector<8xf32> to vector<8x1xf32>
      %cst_37 = arith.constant 1.000000e-24 : f32
      %72 = vector.broadcast %cst_37 : f32 to vector<8x1xf32>
      %73 = arith.maximumf %71, %72 : vector<8x1xf32>
      %74 = math.rsqrt %73 : vector<8x1xf32>
      %75 = vector.broadcast %74 : vector<8x1xf32> to vector<8x128xf32>
      %76 = arith.mulf %68, %75 : vector<8x128xf32>
      %c0_38 = arith.constant 0 : index
      %c0_39 = arith.constant 0 : index
      %77 = vector.load %arg8[%c0_38, %c0_39] : memref<8x128xf32, #tpu.memory_space<vmem>>, vector<8x128xf32>
      %78 = arith.mulf %76, %77 : vector<8x128xf32>
      %cst_40 = arith.constant 2.000000e+00 : f32
      %79 = vector.broadcast %cst_40 : f32 to vector<8x128xf32>
      %80 = arith.mulf %78, %79 : vector<8x128xf32>
      %c0_41 = arith.constant 0 : index
      %c0_42 = arith.constant 0 : index
      %81 = vector.load %arg10[%c0_41, %c0_42] : memref<8x128xf32, #tpu.memory_space<vmem>>, vector<8x128xf32>
      tpu.vector_store %arg10[%c0_41, %c0_42], %80 {strides = array<i32>} : memref<8x128xf32, #tpu.memory_space<vmem>>, vector<8x128xf32>,
    } else {
    }
    return
  }
  func.func @transform_0(%arg0: i32) -> (i32, i32, i32) {
    %c0_i32 = arith.constant 0 : i32
    %c0_i32_0 = arith.constant 0 : i32
    %c0_i32_1 = arith.constant 0 : i32
    return %c0_i32, %arg0, %c0_i32_0 : i32, i32, i32
  }
  func.func @transform_1(%arg0: i32) -> (i32, i32) {
    %c0_i32 = arith.constant 0 : i32
    %c0_i32_0 = arith.constant 0 : i32
    %c0_i32_1 = arith.constant 0 : i32
    return %c0_i32, %c0_i32_0 : i32, i32
  }
  func.func @transform_2(%arg0: i32) -> (i32, i32) {
    %c0_i32 = arith.constant 0 : i32
    %c0_i32_0 = arith.constant 0 : i32
    %c0_i32_1 = arith.constant 0 : i32
    return %c0_i32, %c0_i32_0 : i32, i32
  }
  func.func @transform_3(%arg0: i32) -> (i32, i32) {
    %c0_i32 = arith.constant 0 : i32
    %c0_i32_0 = arith.constant 0 : i32
    %c0_i32_1 = arith.constant 0 : i32
    return %c0_i32, %c0_i32_0 : i32, i32
  }
  func.func @transform_4(%arg0: i32) -> (i32, i32) {
    %c0_i32 = arith.constant 0 : i32
    %c0_i32_0 = arith.constant 0 : i32
    %c0_i32_1 = arith.constant 0 : i32
    return %c0_i32, %c0_i32_0 : i32, i32
  }
  func.func @transform_5(%arg0: i32) -> (i32, i32) {
    %c0_i32 = arith.constant 0 : i32
    %c0_i32_0 = arith.constant 0 : i32
    %c0_i32_1 = arith.constant 0 : i32
    return %c0_i32, %c0_i32_0 : i32, i32
  }
  func.func @transform_6(%arg0: i32) -> (i32, i32) {
    %c0_i32 = arith.constant 0 : i32
    %c0_i32_0 = arith.constant 0 : i32
    %c0_i32_1 = arith.constant 0 : i32
    return %c0_i32, %c0_i32_0 : i32, i32
  }
  func.func @transform_7(%arg0: i32) -> (i32, i32) {
    %c0_i32 = arith.constant 0 : i32
    %c0_i32_0 = arith.constant 0 : i32
    %c0_i32_1 = arith.constant 0 : i32
    return %c0_i32, %c0_i32_0 : i32, i32
  }
  func.func @transform_8(%arg0: i32) -> (i32, i32) {
    %c0_i32 = arith.constant 0 : i32
    %c0_i32_0 = arith.constant 0 : i32
    %c0_i32_1 = arith.constant 0 : i32
    return %c0_i32, %c0_i32_0 : i32, i32
  }
  func.func @transform_9(%arg0: i32) -> (i32, i32) {
    %c0_i32 = arith.constant 0 : i32
    %c0_i32_0 = arith.constant 0 : i32
    %c0_i32_1 = arith.constant 0 : i32
    return %c0_i32, %c0_i32_0 : i32, i32
  }
}

</mosaic_0001>

<llo_original>
// kernel: memory_bank_forward.1
$region0: #{memory_bank_forward.1}
  #allocation0 [shape = 'u32[]', space=smem, size = 0x4, offset = 0x4, fixed_abs, tag = 'smem constant byte address 0x4 - core index']
  #allocation1 [shape = 'u32[72,128]{1,0:T(1,128)}', space=vmem, size = 0x9000, scoped, tag = 'internal scratch']
  #allocation2 [shape = 'f32[8,256]{1,0:T(8,128)}', space=vmem, size = 0x2000, scoped, tag = 'scratch operand']
  %s0 = inlined_call_operand.hbm [shape: bf16[8,16,256], index: 0, kind: input, shape index: {}]
  %s1 = inlined_call_operand.hbm [shape: f32[256,128], index: 1, kind: input, shape index: {}]
  %s2 = inlined_call_operand.hbm [shape: f32[1,128], index: 2, kind: input, shape index: {}]
  %s3 = inlined_call_operand.vmem [shape: f32[1,256], index: 3, kind: input, shape index: {}]
  %s4 = inlined_call_operand.hbm [shape: f32[1,256], index: 4, kind: input, shape index: {}]
  %s5 = inlined_call_operand.vmem [shape: f32[1,128], index: 5, kind: input, shape index: {}]
  %s6 = inlined_call_operand.vmem [shape: f32[1,128], index: 6, kind: input, shape index: {}]
  %s7 = inlined_call_operand.hbm [shape: f32[8,128], index: 7, kind: input, shape index: {}]
  %s8 = inlined_call_operand.hbm [shape: f32[8,256], index: 8, kind: output, shape index: {0}]
  %s9 = inlined_call_operand.hbm [shape: f32[8,128], index: 9, kind: output, shape index: {1}]
  %10 = xla_tuple %s8, %s9
  %s11 = sld [smem:[#allocation0]]
  $region101: #{memory_bank_forward.1} parent=0
    _
  %s13 = ssub.s32 1, %s11
  %s14 = scalar_select 0, %s13, %s11
  $region1: #{memory_bank_forward.1} parent=0
    #allocation3 [shape = 'u8[65536]{0}', space=vmem, size = 0x10000, scoped, tag = 'input window, operand 0']
    #allocation4 [shape = 's32[2]{0}', space=sflag, size = 0x8, scoped, tag = 'scoped memory for memory_bank_forward.1']
    #allocation5 [shape = 's32[2]{0}', space=sflag, size = 0x8, scoped, tag = 'scoped memory for memory_bank_forward.1']
    #allocation6 [shape = 'u8[131072]{0}', space=vmem, size = 0x20000, scoped, tag = 'input window, operand 1, single buffered']
    #allocation7 [shape = 's32[1]{0}', space=sflag, size = 0x4, scoped, tag = 'scoped memory for memory_bank_forward.1']
    #allocation8 [shape = 'u8[512]{0}', space=vmem, size = 0x400, scoped, tag = 'input window, operand 2, single buffered']
    #allocation9 [shape = 'u8[1024]{0}', space=vmem, size = 0x400, scoped, tag = 'input window, operand 4, single buffered']
    #allocation10 [shape = 's32[1]{0}', space=sflag, size = 0x4, scoped, tag = 'scoped memory for memory_bank_forward.1']
    #allocation11 [shape = 'u8[4096]{0}', space=vmem, size = 0x1000, scoped, tag = 'input window, operand 7, single buffered']
    #allocation12 [shape = 'u8[8192]{0}', space=vmem, size = 0x2000, scoped, tag = 'output window, operand 0, single buffered']
    #allocation13 [shape = 'u8[4096]{0}', space=vmem, size = 0x1000, scoped, tag = 'output window, operand 1, single buffered']
    #allocation14 [shape = 's32[1]{0}', space=sflag, size = 0x4, scoped, tag = 'scoped memory for memory_bank_forward.1']
    %15 = vsyncpa [#allocation4], 0
    %s16 = scalar_lea.sflag [#allocation4], 1
    %17 = vsyncpa %s16, 0
    %18 = vsyncpa [#allocation7], 0
    %19 = vsyncpa [#allocation10], 0
    %20 = vsyncpa [#allocation5], 0
    %21 = vsyncpa [#allocation14], 0
    loop: start=0, step=1, limit=4
    $region2: #{memory_bank_forward.1} parent=1 // loop_pre_header
      _
    $region3: #{memory_bank_forward.1} parent=1 // loop_header
      %s23 = sphi 0, %s27
      %p24 = scmp.ge.s32.totalorder %s23, 4
      %s33 = sphi 0, %s35
      %s36 = sphi 0, %s33
      %s37 = sphi 0, %s36
      %s53 = sphi 0, %s37
      %s57 = sphi 0, %s57
      %s59 = sphi 0, %s57
      %s60 = sphi 0, %s59
      %s74 = sphi 0, %s60
      %s78 = sphi 0, %s78
      %s80 = sphi 0, %s78
      %s81 = sphi 0, %s80
      %s95 = sphi 0, %s81
      %s99 = sphi 0, %s99
      %s101 = sphi 0, %s99
      %s102 = sphi 0, %s101
      %s116 = sphi 0, %s102
      %s120 = sphi 0, %s120
      %s122 = sphi 0, %s120
      %s123 = sphi 0, %s122
      %s137 = sphi 0, %s123
      %s141 = sphi 0, %s141
      %s143 = sphi 0, %s141
      %s144 = sphi 0, %s143
      %s158 = sphi 0, %s144
      %s162 = sphi 0, %s162
      %s164 = sphi 0, %s162
      %s165 = sphi 0, %s164
      %s179 = sphi 0, %s165
      %s183 = sphi 0, %s183
      %s185 = sphi 0, %s183
      %s186 = sphi 0, %s185
      %s200 = sphi 0, %s186
      %s204 = sphi 0, %s204
      %s206 = sphi 0, %s204
      %s207 = sphi 0, %s206
      %s221 = sphi 0, %s207
      %s225 = sphi 0, %s225
      %s227 = sphi 0, %s225
      %s228 = sphi 0, %s227
      %s242 = sphi 0, %s228
    $region4: #{memory_bank_forward.1} parent=1 // loop_header_branch
      %26 = sbr.rel (%p24) target = $region8
    $region5: #{memory_bank_forward.1} parent=1 // loop_body
      %s28 = ssub.s32 %s23, 1
      %s29 = ssub.s32 %s23, 2
      %s30 = sadd.s32 %s23, 1
      %s31 = ssub.s32 %s23, %s30
      %p32 = scmp.eq.s32.totalorder %s31, 0
      %s34 = sadd.s32 %s33, 1
      %s35 = scalar_select %p32, %s33, %s34
      %p38 = pneg %p32
      %p39 = scmp.eq.s32.totalorder %s23, 1
      %p40 = por %p38, %p39
      %p41 = scmp.ne.s32.totalorder %s33, %s36
      %p42 = scmp.eq.s32.totalorder %s23, 0
      %p43 = por %p41, %p42
      %p44 = scmp.ne.s32.totalorder %s33, %s36
      %p45 = scmp.eq.s32.totalorder %s28, 1
      %p46 = por %p44, %p45
      %p47 = scmp.ne.s32.totalorder %s36, %s37
      %p48 = scmp.eq.s32.totalorder %s28, 0
      %p49 = por %p47, %p48
      %p50 = scmp.ne.s32.totalorder %s36, %s37
      %p51 = scmp.eq.s32.totalorder %s29, 1
      %p52 = por %p50, %p51
      %p54 = scmp.ne.s32.totalorder %s37, %s53
      %p55 = scmp.eq.s32.totalorder %s29, 0
      %p56 = por %p54, %p55
      %s58 = sadd.s32 %s57, 1
      %p61 = scmp.eq.s32.totalorder %s23, 1
      %p62 = scmp.ne.s32.totalorder %s57, %s59
      %p63 = scmp.eq.s32.totalorder %s23, 0
      %p64 = por %p62, %p63
      %p65 = scmp.ne.s32.totalorder %s57, %s59
      %p66 = scmp.eq.s32.totalorder %s28, 1
      %p67 = por %p65, %p66
      %p68 = scmp.ne.s32.totalorder %s59, %s60
      %p69 = scmp.eq.s32.totalorder %s28, 0
      %p70 = por %p68, %p69
      %p71 = scmp.ne.s32.totalorder %s59, %s60
      %p72 = scmp.eq.s32.totalorder %s29, 1
      %p73 = por %p71, %p72
      %p75 = scmp.ne.s32.totalorder %s60, %s74
      %p76 = scmp.eq.s32.totalorder %s29, 0
      %p77 = por %p75, %p76
      %s79 = sadd.s32 %s78, 1
      %p82 = scmp.eq.s32.totalorder %s23, 1
      %p83 = scmp.ne.s32.totalorder %s78, %s80
      %p84 = scmp.eq.s32.totalorder %s23, 0
      %p85 = por %p83, %p84
      %p86 = scmp.ne.s32.totalorder %s78, %s80
      %p87 = scmp.eq.s32.totalorder %s28, 1
      %p88 = por %p86, %p87
      %p89 = scmp.ne.s32.totalorder %s80, %s81
      %p90 = scmp.eq.s32.totalorder %s28, 0
      %p91 = por %p89, %p90
      %p92 = scmp.ne.s32.totalorder %s80, %s81
      %p93 = scmp.eq.s32.totalorder %s29, 1
      %p94 = por %p92, %p93
      %p96 = scmp.ne.s32.totalorder %s81, %s95
      %p97 = scmp.eq.s32.totalorder %s29, 0
      %p98 = por %p96, %p97
      %s100 = sadd.s32 %s99, 1
      %p103 = scmp.eq.s32.totalorder %s23, 1
      %p104 = scmp.ne.s32.totalorder %s99, %s101
      %p105 = scmp.eq.s32.totalorder %s23, 0
      %p106 = por %p104, %p105
      %p107 = scmp.ne.s32.totalorder %s99, %s101
      %p108 = scmp.eq.s32.totalorder %s28, 1
      %p109 = por %p107, %p108
      %p110 = scmp.ne.s32.totalorder %s101, %s102
      %p111 = scmp.eq.s32.totalorder %s28, 0
      %p112 = por %p110, %p111
      %p113 = scmp.ne.s32.totalorder %s101, %s102
      %p114 = scmp.eq.s32.totalorder %s29, 1
      %p115 = por %p113, %p114
      %p117 = scmp.ne.s32.totalorder %s102, %s116
      %p118 = scmp.eq.s32.totalorder %s29, 0
      %p119 = por %p117, %p118
      %s121 = sadd.s32 %s120, 1
      %p124 = scmp.eq.s32.totalorder %s23, 1
      %p125 = scmp.ne.s32.totalorder %s120, %s122
      %p126 = scmp.eq.s32.totalorder %s23, 0
      %p127 = por %p125, %p126
      %p128 = scmp.ne.s32.totalorder %s120, %s122
      %p129 = scmp.eq.s32.totalorder %s28, 1
      %p130 = por %p128, %p129
      %p131 = scmp.ne.s32.totalorder %s122, %s123
      %p132 = scmp.eq.s32.totalorder %s28, 0
      %p133 = por %p131, %p132
      %p134 = scmp.ne.s32.totalorder %s122, %s123
      %p135 = scmp.eq.s32.totalorder %s29, 1
      %p136 = por %p134, %p135
      %p138 = scmp.ne.s32.totalorder %s123, %s137
      %p139 = scmp.eq.s32.totalorder %s29, 0
      %p140 = por %p138, %p139
      %s142 = sadd.s32 %s141, 1
      %p145 = scmp.eq.s32.totalorder %s23, 1
      %p146 = scmp.ne.s32.totalorder %s141, %s143
      %p147 = scmp.eq.s32.totalorder %s23, 0
      %p148 = por %p146, %p147
      %p149 = scmp.ne.s32.totalorder %s141, %s143
      %p150 = scmp.eq.s32.totalorder %s28, 1
      %p151 = por %p149, %p150
      %p152 = scmp.ne.s32.totalorder %s143, %s144
      %p153 = scmp.eq.s32.totalorder %s28, 0
      %p154 = por %p152, %p153
      %p155 = scmp.ne.s32.totalorder %s143, %s144
      %p156 = scmp.eq.s32.totalorder %s29, 1
      %p157 = por %p155, %p156
      %p159 = scmp.ne.s32.totalorder %s144, %s158
      %p160 = scmp.eq.s32.totalorder %s29, 0
      %p161 = por %p159, %p160
      %s163 = sadd.s32 %s162, 1
      %p166 = scmp.eq.s32.totalorder %s23, 1
      %p167 = scmp.ne.s32.totalorder %s162, %s164
      %p168 = scmp.eq.s32.totalorder %s23, 0
      %p169 = por %p167, %p168
      %p170 = scmp.ne.s32.totalorder %s162, %s164
      %p171 = scmp.eq.s32.totalorder %s28, 1
      %p172 = por %p170, %p171
      %p173 = scmp.ne.s32.totalorder %s164, %s165
      %p174 = scmp.eq.s32.totalorder %s28, 0
      %p175 = por %p173, %p174
      %p176 = scmp.ne.s32.totalorder %s164, %s165
      %p177 = scmp.eq.s32.totalorder %s29, 1
      %p178 = por %p176, %p177
      %p180 = scmp.ne.s32.totalorder %s165, %s179
      %p181 = scmp.eq.s32.totalorder %s29, 0
      %p182 = por %p180, %p181
      %s184 = sadd.s32 %s183, 1
      %p187 = scmp.eq.s32.totalorder %s23, 1
      %p188 = scmp.ne.s32.totalorder %s183, %s185
      %p189 = scmp.eq.s32.totalorder %s23, 0
      %p190 = por %p188, %p189
      %p191 = scmp.ne.s32.totalorder %s183, %s185
      %p192 = scmp.eq.s32.totalorder %s28, 1
      %p193 = por %p191, %p192
      %p194 = scmp.ne.s32.totalorder %s185, %s186
      %p195 = scmp.eq.s32.totalorder %s28, 0
      %p196 = por %p194, %p195
      %p197 = scmp.ne.s32.totalorder %s185, %s186
      %p198 = scmp.eq.s32.totalorder %s29, 1
      %p199 = por %p197, %p198
      %p201 = scmp.ne.s32.totalorder %s186, %s200
      %p202 = scmp.eq.s32.totalorder %s29, 0
      %p203 = por %p201, %p202
      %s205 = sadd.s32 %s204, 1
      %p208 = scmp.eq.s32.totalorder %s23, 1
      %p209 = scmp.ne.s32.totalorder %s204, %s206
      %p210 = scmp.eq.s32.totalorder %s23, 0
      %p211 = por %p209, %p210
      %p212 = scmp.ne.s32.totalorder %s204, %s206
      %p213 = scmp.eq.s32.totalorder %s28, 1
      %p214 = por %p212, %p213
      %p215 = scmp.ne.s32.totalorder %s206, %s207
      %p216 = scmp.eq.s32.totalorder %s28, 0
      %p217 = por %p215, %p216
      %p218 = scmp.ne.s32.totalorder %s206, %s207
      %p219 = scmp.eq.s32.totalorder %s29, 1
      %p220 = por %p218, %p219
      %p222 = scmp.ne.s32.totalorder %s207, %s221
      %p223 = scmp.eq.s32.totalorder %s29, 0
      %p224 = por %p222, %p223
      %s226 = sadd.s32 %s225, 1
      %p229 = scmp.eq.s32.totalorder %s23, 1
      %p230 = scmp.ne.s32.totalorder %s225, %s227
      %p231 = scmp.eq.s32.totalorder %s23, 0
      %p232 = por %p230, %p231
      %p233 = scmp.ne.s32.totalorder %s225, %s227
      %p234 = scmp.eq.s32.totalorder %s28, 1
      %p235 = por %p233, %p234
      %p236 = scmp.ne.s32.totalorder %s227, %s228
      %p237 = scmp.eq.s32.totalorder %s28, 0
      %p238 = por %p236, %p237
      %p239 = scmp.ne.s32.totalorder %s227, %s228
      %p240 = scmp.eq.s32.totalorder %s29, 1
      %p241 = por %p239, %p240
      %p243 = scmp.ne.s32.totalorder %s228, %s242
      %p244 = scmp.eq.s32.totalorder %s29, 0
      %p245 = por %p243, %p244
      %p246 = scmp.le.s32.totalorder 1, %s23
      %p247 = scmp.lt.s32.totalorder %s23, 3
      %p248 = pnand %p246, %p247
      %p249 = pneg %p248
      // Predicated region
      $region9: #{memory_bank_forward.1} parent=5 // pred_check
        _
      $region10: #{memory_bank_forward.1} parent=5 // pred_check_branch
        %251 = sbr.rel (%p248) target = $region12
      $region11: #{memory_bank_forward.1} parent=5 // pred_region
        %s252 = ssub.s32 %s23, 1
        // Predicated region
        $region13: #{memory_bank_forward.1} parent=11 // pred_check
          %p253 = pneg %p70
        $region14: #{memory_bank_forward.1} parent=11 // pred_check_branch
          %255 = sbr.rel (%p253) target = $region16
        $region15: #{memory_bank_forward.1} parent=11 // pred_region
          %257 = vsyncadd [#allocation7], 0
          %s258 = sshll.u32 %s1, 4
          %s259 = int_to_ptr.hbm [resolvable:$true] %s258
          %s260 = sshll.u32 [#allocation6], 4
          %s261 = int_to_ptr.vmem [resolvable:$true] %s260
          %266 = dma.hbm_to_vmem [thread:$0]  %s259, 4096, %s261, [#allocation7], 128, 128, 8
        $region16: #{memory_bank_forward.1} parent=11 // pred_fallthru
          _
        // Predicated region
        $region17: #{memory_bank_forward.1} parent=11 // pred_check
          %p267 = pneg %p91
        $region18: #{memory_bank_forward.1} parent=11 // pred_check_branch
          %269 = sbr.rel (%p267) target = $region20
        $region19: #{memory_bank_forward.1} parent=11 // pred_region
          %271 = vsyncadd [#allocation7], 0
          %s273 = sshll.u32 %s2, 4
          %s274 = int_to_ptr.hbm [resolvable:$true] %s273
          %s275 = sshll.u32 [#allocation8], 4
          %s276 = int_to_ptr.vmem [resolvable:$true] %s275
          %278 = dma.hbm_to_vmem [thread:$0]  %s274, 16, %s276, [#allocation7]
        $region20: #{memory_bank_forward.1} parent=11 // pred_fallthru
          _
        // Predicated region
        $region21: #{memory_bank_forward.1} parent=11 // pred_check
          %p279 = pneg %p112
        $region22: #{memory_bank_forward.1} parent=11 // pred_check_branch
          %281 = sbr.rel (%p279) target = $region24
        $region23: #{memory_bank_forward.1} parent=11 // pred_region
          _
        $region24: #{memory_bank_forward.1} parent=11 // pred_fallthru
          _
        // Predicated region
        $region25: #{memory_bank_forward.1} parent=11 // pred_check
          %p282 = pneg %p133
        $region26: #{memory_bank_forward.1} parent=11 // pred_check_branch
          %284 = sbr.rel (%p282) target = $region28
        $region27: #{memory_bank_forward.1} parent=11 // pred_region
          %286 = vsyncadd [#allocation10], 0
          %s288 = sshll.u32 %s4, 4
          %s289 = int_to_ptr.hbm [resolvable:$true] %s288
          %s290 = sshll.u32 [#allocation9], 4
          %s291 = int_to_ptr.vmem [resolvable:$true] %s290
          %293 = dma.hbm_to_vmem [thread:$0]  %s289, 32, %s291, [#allocation10]
        $region28: #{memory_bank_forward.1} parent=11 // pred_fallthru
          _
        // Predicated region
        $region29: #{memory_bank_forward.1} parent=11 // pred_check
          %p294 = pneg %p154
        $region30: #{memory_bank_forward.1} parent=11 // pred_check_branch
          %296 = sbr.rel (%p294) target = $region32
        $region31: #{memory_bank_forward.1} parent=11 // pred_region
          _
        $region32: #{memory_bank_forward.1} parent=11 // pred_fallthru
          _
        // Predicated region
        $region33: #{memory_bank_forward.1} parent=11 // pred_check
          %p297 = pneg %p175
        $region34: #{memory_bank_forward.1} parent=11 // pred_check_branch
          %299 = sbr.rel (%p297) target = $region36
        $region35: #{memory_bank_forward.1} parent=11 // pred_region
          _
        $region36: #{memory_bank_forward.1} parent=11 // pred_fallthru
          _
        // Predicated region
        $region37: #{memory_bank_forward.1} parent=11 // pred_check
          %p300 = pneg %p196
        $region38: #{memory_bank_forward.1} parent=11 // pred_check_branch
          %302 = sbr.rel (%p300) target = $region40
        $region39: #{memory_bank_forward.1} parent=11 // pred_region
          %304 = vsyncadd [#allocation10], 0
          %s306 = sshll.u32 %s7, 4
          %s307 = int_to_ptr.hbm [resolvable:$true] %s306
          %s308 = sshll.u32 [#allocation11], 4
          %s309 = int_to_ptr.vmem [resolvable:$true] %s308
          %311 = dma.hbm_to_vmem [thread:$0]  %s307, 128, %s309, [#allocation10]
        $region40: #{memory_bank_forward.1} parent=11 // pred_fallthru
          _
      $region12: #{memory_bank_forward.1} parent=5 // pred_fallthru
        _
      %p312 = scmp.lt.s32.totalorder %s23, 2
      // Predicated region
      $region41: #{memory_bank_forward.1} parent=5 // pred_check
        %p313 = pneg %p312
      $region42: #{memory_bank_forward.1} parent=5 // pred_check_branch
        %315 = sbr.rel (%p313) target = $region44
      $region43: #{memory_bank_forward.1} parent=5 // pred_region
        // Predicated region
        $region45: #{memory_bank_forward.1} parent=43 // pred_check
          %p316 = pneg %p43
        $region46: #{memory_bank_forward.1} parent=43 // pred_check_branch
          %318 = sbr.rel (%p316) target = $region48
        $region47: #{memory_bank_forward.1} parent=43 // pred_region
          %s319 = sand.u32 %s33, 1
          %s320 = scalar_lea.sflag [#allocation4], %s319
          %s321 = sand.u32 %s33, 1
          %s322 = smul.addr %s321, 64
          %s323 = scalar_lea.vmem [#allocation3], %s322
          %325 = vsyncadd %s320, 0
          %s326 = smul.addr %s23, 2
          %s327 = smul.addr %s326, 4
          %s328 = scalar_lea.hbm %s0, %s327
          %s329 = sshll.u32 %s328, 4
          %s330 = int_to_ptr.hbm [resolvable:$true] %s329
          %s331 = sshll.u32 %s323, 4
          %s332 = int_to_ptr.vmem [resolvable:$true] %s331
          %337 = dma.hbm_to_vmem [thread:$0]  %s330, 1024, %s332, %s320, 256, 128, 8
        $region48: #{memory_bank_forward.1} parent=43 // pred_fallthru
          _
      $region44: #{memory_bank_forward.1} parent=5 // pred_fallthru
        _
      %p338 = scmp.le.s32.totalorder 1, %s23
      %p339 = scmp.lt.s32.totalorder %s23, 3
      %p340 = pnand %p338, %p339
      %p341 = pneg %p340
      // Predicated region
      $region49: #{memory_bank_forward.1} parent=5 // pred_check
        _
      $region50: #{memory_bank_forward.1} parent=5 // pred_check_branch
        %343 = sbr.rel (%p340) target = $region52
      $region51: #{memory_bank_forward.1} parent=5 // pred_region
        %s344 = ssub.s32 %s23, 1
        %s345 = sand.u32 %s36, 1
        %s346 = scalar_lea.sflag [#allocation4], %s345
        %s347 = sand.u32 %s36, 1
        %s348 = smul.addr %s347, 64
        %s349 = scalar_lea.vmem [#allocation3], %s348
        // Predicated region
        $region53: #{memory_bank_forward.1} parent=51 // pred_check
          %p350 = pneg %p49
        $region54: #{memory_bank_forward.1} parent=51 // pred_check_branch
          %352 = sbr.rel (%p350) target = $region56
        $region55: #{memory_bank_forward.1} parent=51 // pred_region
          %354 = dma.done %s346, 1024
        $region56: #{memory_bank_forward.1} parent=51 // pred_fallthru
          _
        // Predicated region
        $region57: #{memory_bank_forward.1} parent=51 // pred_check
          %p355 = pneg %p70
        $region58: #{memory_bank_forward.1} parent=51 // pred_check_branch
          %357 = sbr.rel (%p355) target = $region60
        $region59: #{memory_bank_forward.1} parent=51 // pred_region
          %359 = dma.done [#allocation7], 4096
        $region60: #{memory_bank_forward.1} parent=51 // pred_fallthru
          _
        // Predicated region
        $region61: #{memory_bank_forward.1} parent=51 // pred_check
          %p360 = pneg %p91
        $region62: #{memory_bank_forward.1} parent=51 // pred_check_branch
          %362 = sbr.rel (%p360) target = $region64
        $region63: #{memory_bank_forward.1} parent=51 // pred_region
          %364 = dma.done [#allocation7], 16
        $region64: #{memory_bank_forward.1} parent=51 // pred_fallthru
          _
        // Predicated region
        $region65: #{memory_bank_forward.1} parent=51 // pred_check
          %p365 = pneg %p133
        $region66: #{memory_bank_forward.1} parent=51 // pred_check_branch
          %367 = sbr.rel (%p365) target = $region68
        $region67: #{memory_bank_forward.1} parent=51 // pred_region
          %369 = dma.done [#allocation10], 32
        $region68: #{memory_bank_forward.1} parent=51 // pred_fallthru
          _
        // Predicated region
        $region69: #{memory_bank_forward.1} parent=51 // pred_check
          %p370 = pneg %p196
        $region70: #{memory_bank_forward.1} parent=51 // pred_check_branch
          %372 = sbr.rel (%p370) target = $region72
        $region71: #{memory_bank_forward.1} parent=51 // pred_region
          %374 = dma.done [#allocation10], 128
        $region72: #{memory_bank_forward.1} parent=51 // pred_fallthru
          _
        %s375 = sand.u32 %s36, 1
        %s376 = scalar_lea.sflag [#allocation4], %s375
        %s377 = sand.u32 %s36, 1
        %s378 = smul.addr %s377, 64
        %s379 = scalar_lea.vmem [#allocation3], %s378
        %p380 = pneg %p49
        %p381 = pneg %p46
        %p382 = pneg %p70
        %p383 = pneg %p67
        %p384 = pneg %p91
        %p385 = pneg %p88
        %p386 = pneg %p112
        %p387 = pneg %p109
        %p388 = pneg %p133
        %p389 = pneg %p130
        %p390 = pneg %p154
        %p391 = pneg %p151
        %p392 = pneg %p175
        %p393 = pneg %p172
        %p394 = pneg %p196
        %p395 = pneg %p193
        %p396 = pneg %p217
        %p397 = pneg %p214
        %p398 = pneg %p238
        %p399 = pneg %p235
        %p400 = scmp.eq.s32.totalorder %s28, 0
        // Predicated region
        $region73: #{memory_bank_forward.1} parent=51 // pred_check
          %p401 = pneg %p400
        $region74: #{memory_bank_forward.1} parent=51 // pred_check_branch
          %403 = sbr.rel (%p401) target = $region76
        $region75: #{memory_bank_forward.1} parent=51 // pred_region
          %404 = vst [vmem:[#allocation2] sm:$0xff] 0.0
          %405 = vst [vmem:[#allocation2 + $0x8] sm:$0xff] 0.0
        $region76: #{memory_bank_forward.1} parent=51 // pred_fallthru
          _
        %v406 = vld [vmem:[#allocation2] sm:$0xff]
        %v407 = vld [vmem:[#allocation2 + $0x8] sm:$0xff]
        %v408 = vld [vmem:[%s349] sm:$0xff]
        %v409 = vld [vmem:[%s349 + $0x8] sm:$0xff]
        %v410 = vld [vmem:[%s349 + $0x10] sm:$0xff]
        %v411 = vld [vmem:[%s349 + $0x18] sm:$0xff]
        %v412 = vld [vmem:[%s349 + $0x20] sm:$0xff]
        %v413 = vld [vmem:[%s349 + $0x28] sm:$0xff]
        %v414 = vld [vmem:[%s349 + $0x30] sm:$0xff]
        %v415 = vld [vmem:[%s349 + $0x38] sm:$0xff]
        %v416 = vunpack.c.l.bf16 %v408
        %v417 = vunpack.c.h.bf16 %v408
        %v418 = vunpack.c.l.bf16 %v409
        %v419 = vunpack.c.h.bf16 %v409
        %v420 = vunpack.c.l.bf16 %v410
        %v421 = vunpack.c.h.bf16 %v410
        %v422 = vunpack.c.l.bf16 %v411
        %v423 = vunpack.c.h.bf16 %v411
        %v424 = vunpack.c.l.bf16 %v412
        %v425 = vunpack.c.h.bf16 %v412
        %v426 = vunpack.c.l.bf16 %v413
        %v427 = vunpack.c.h.bf16 %v413
        %v428 = vunpack.c.l.bf16 %v414
        %v429 = vunpack.c.h.bf16 %v414
        %v430 = vunpack.c.l.bf16 %v415
        %v431 = vunpack.c.h.bf16 %v415
        %v432 = vrot.slane %v416, 4
        %v433 = vadd.f32 %v416, %v432
        %v434 = vrot.slane %v433, 2
        %v435 = vadd.f32 %v433, %v434
        %v436 = vrot.slane %v435, 1
        %v437 = vadd.f32 %v435, %v436
        %v438 = vrot.slane %v417, 4
        %v439 = vadd.f32 %v417, %v438
        %v440 = vrot.slane %v439, 2
        %v441 = vadd.f32 %v439, %v440
        %v442 = vrot.slane %v441, 1
        %v443 = vadd.f32 %v441, %v442
        %v444 = vrot.slane %v418, 4
        %v445 = vadd.f32 %v418, %v444
        %v446 = vrot.slane %v445, 2
        %v447 = vadd.f32 %v445, %v446
        %v448 = vrot.slane %v447, 1
        %v449 = vadd.f32 %v447, %v448
        %v450 = vrot.slane %v419, 4
        %v451 = vadd.f32 %v419, %v450
        %v452 = vrot.slane %v451, 2
        %v453 = vadd.f32 %v451, %v452
        %v454 = vrot.slane %v453, 1
        %v455 = vadd.f32 %v453, %v454
        %v456 = vrot.slane %v420, 4
        %v457 = vadd.f32 %v420, %v456
        %v458 = vrot.slane %v457, 2
        %v459 = vadd.f32 %v457, %v458
        %v460 = vrot.slane %v459, 1
        %v461 = vadd.f32 %v459, %v460
        %v462 = vrot.slane %v421, 4
        %v463 = vadd.f32 %v421, %v462
        %v464 = vrot.slane %v463, 2
        %v465 = vadd.f32 %v463, %v464
        %v466 = vrot.slane %v465, 1
        %v467 = vadd.f32 %v465, %v466
        %v468 = vrot.slane %v422, 4
        %v469 = vadd.f32 %v422, %v468
        %v470 = vrot.slane %v469, 2
        %v471 = vadd.f32 %v469, %v470
        %v472 = vrot.slane %v471, 1
        %v473 = vadd.f32 %v471, %v472
        %v474 = vrot.slane %v423, 4
        %v475 = vadd.f32 %v423, %v474
        %v476 = vrot.slane %v475, 2
        %v477 = vadd.f32 %v475, %v476
        %v478 = vrot.slane %v477, 1
        %v479 = vadd.f32 %v477, %v478
        %v480 = vrot.slane %v424, 4
        %v481 = vadd.f32 %v424, %v480
        %v482 = vrot.slane %v481, 2
        %v483 = vadd.f32 %v481, %v482
        %v484 = vrot.slane %v483, 1
        %v485 = vadd.f32 %v483, %v484
        %v486 = vrot.slane %v425, 4
        %v487 = vadd.f32 %v425, %v486
        %v488 = vrot.slane %v487, 2
        %v489 = vadd.f32 %v487, %v488
        %v490 = vrot.slane %v489, 1
        %v491 = vadd.f32 %v489, %v490
        %v492 = vrot.slane %v426, 4
        %v493 = vadd.f32 %v426, %v492
        %v494 = vrot.slane %v493, 2
        %v495 = vadd.f32 %v493, %v494
        %v496 = vrot.slane %v495, 1
        %v497 = vadd.f32 %v495, %v496
        %v498 = vrot.slane %v427, 4
        %v499 = vadd.f32 %v427, %v498
        %v500 = vrot.slane %v499, 2
        %v501 = vadd.f32 %v499, %v500
        %v502 = vrot.slane %v501, 1
        %v503 = vadd.f32 %v501, %v502
        %v504 = vrot.slane %v428, 4
        %v505 = vadd.f32 %v428, %v504
        %v506 = vrot.slane %v505, 2
        %v507 = vadd.f32 %v505, %v506
        %v508 = vrot.slane %v507, 1
        %v509 = vadd.f32 %v507, %v508
        %v510 = vrot.slane %v429, 4
        %v511 = vadd.f32 %v429, %v510
        %v512 = vrot.slane %v511, 2
        %v513 = vadd.f32 %v511, %v512
        %v514 = vrot.slane %v513, 1
        %v515 = vadd.f32 %v513, %v514
        %v516 = vrot.slane %v430, 4
        %v517 = vadd.f32 %v430, %v516
        %v518 = vrot.slane %v517, 2
        %v519 = vadd.f32 %v517, %v518
        %v520 = vrot.slane %v519, 1
        %v521 = vadd.f32 %v519, %v520
        %v522 = vrot.slane %v431, 4
        %v523 = vadd.f32 %v431, %v522
        %v524 = vrot.slane %v523, 2
        %v525 = vadd.f32 %v523, %v524
        %v526 = vrot.slane %v525, 1
        %v527 = vadd.f32 %v525, %v526
        %vm544 = vcmask 1041409
        %v545 = vsel %vm544, %v449, %v437
        %vm546 = vcmask 1042434
        %v547 = vsel %vm546, %v461, %v545
        %vm548 = vcmask 1043459
        %v549 = vsel %vm548, %v473, %v547
        %vm550 = vcmask 1044484
        %v551 = vsel %vm550, %v485, %v549
        %vm552 = vcmask 1045509
        %v553 = vsel %vm552, %v497, %v551
        %vm554 = vcmask 1046534
        %v555 = vsel %vm554, %v509, %v553
        %vm556 = vcmask 1047559
        %v557 = vsel %vm556, %v521, %v555
        %v558 = vsel %vm544, %v455, %v443
        %v559 = vsel %vm546, %v467, %v558
        %v560 = vsel %vm548, %v479, %v559
        %v561 = vsel %vm550, %v491, %v560
        %v562 = vsel %vm552, %v503, %v561
        %v563 = vsel %vm554, %v515, %v562
        %v564 = vsel %vm556, %v527, %v563
        %v567 = vadd.f32 %v406, %v557
        %v568 = vadd.f32 %v407, %v564
        %569 = vst [vmem:[#allocation2] sm:$0xff] %v567
        %570 = vst [vmem:[#allocation2 + $0x8] sm:$0xff] %v568
        %p571 = scmp.eq.s32.totalorder %s28, 1
        // Predicated region
        $region77: #{memory_bank_forward.1} parent=51 // pred_check
          %p572 = pneg %p571
        $region78: #{memory_bank_forward.1} parent=51 // pred_check_branch
          %574 = sbr.rel (%p572) target = $region80
        $region79: #{memory_bank_forward.1} parent=51 // pred_region
          %v575 = vld [vmem:[#allocation2] sm:$0xff]
          %v576 = vld [vmem:[#allocation2 + $0x8] sm:$0xff]
          %v577 = vmul.f32 %v575, 0.0625
          %v578 = vmul.f32 %v576, 0.0625
          %579 = vst [vmem:[#allocation12] sm:$0xff] %v577
          %580 = vst [vmem:[#allocation12 + $0x8] sm:$0xff] %v578
          %v581 = vrot.slane %v577, 4
          %v582 = vadd.f32 %v577, %v581
          %v583 = vrot.slane %v582, 2
          %v584 = vadd.f32 %v582, %v583
          %v585 = vrot.slane %v584, 1
          %v586 = vadd.f32 %v584, %v585
          %v587 = vrot.slane %v578, 4
          %v588 = vadd.f32 %v578, %v587
          %v589 = vrot.slane %v588, 2
          %v590 = vadd.f32 %v588, %v589
          %v591 = vrot.slane %v590, 1
          %v592 = vadd.f32 %v590, %v591
          %v593 = vrcp.pop 8.0
          %v594 = vmul.f32 8.0, %v593
          %v595 = vsub.f32 1.0, %v594
          %v596 = vmul.f32 %v593, %v595
          %v597 = vadd.f32 %v593, %v596
          %vm598 = vweird.f32 %v593
          %v599 = vsel %vm598, %v593, %v597
          %v600 = vmul.f32 %v586, %v599
          %v601 = vmul.f32 %v592, %v599
          %v602 = vsub.f32 %v577, %v600
          %v603 = vsub.f32 %v578, %v601
          %v604 = vmul.f32 %v602, %v602
          %v605 = vmul.f32 %v603, %v603
          %v606 = vrot.slane %v604, 4
          %v607 = vadd.f32 %v604, %v606
          %v608 = vrot.slane %v607, 2
          %v609 = vadd.f32 %v607, %v608
          %v610 = vrot.slane %v609, 1
          %v611 = vadd.f32 %v609, %v610
          %v612 = vrot.slane %v605, 4
          %v613 = vadd.f32 %v605, %v612
          %v614 = vrot.slane %v613, 2
          %v615 = vadd.f32 %v613, %v614
          %v616 = vrot.slane %v615, 1
          %v617 = vadd.f32 %v615, %v616
          %v618 = vmul.f32 %v611, %v599
          %v619 = vmul.f32 %v617, %v599
          %v620 = vadd.f32 %v618, 1e-05
          %v621 = vadd.f32 %v619, 1e-05
          %v622 = vrsqrt.pop %v620
          %v623 = vmul.f32 %v622, %v620
          %v624 = vmul.f32 %v623, %v622
          %v625 = vmul.f32 0.5, %v624
          %v626 = vsub.f32 1.5, %v625
          %v627 = vmul.f32 %v622, %v626
          %vm628 = vweird.f32 %v620
          %vm629 = vweird.f32 %v622
          %vm630 = vmor %vm628, %vm629
          %v631 = vsel %vm630, %v622, %v627
          %v632 = vrsqrt.pop %v621
          %v633 = vmul.f32 %v632, %v621
          %v634 = vmul.f32 %v633, %v632
          %v635 = vmul.f32 0.5, %v634
          %v636 = vsub.f32 1.5, %v635
          %v637 = vmul.f32 %v632, %v636
          %vm638 = vweird.f32 %v621
          %vm639 = vweird.f32 %v632
          %vm640 = vmor %vm638, %vm639
          %v641 = vsel %vm640, %v632, %v637
          %v642 = vmul.f32 %v602, %v631
          %v643 = vmul.f32 %v603, %v641
          %v644 = vld [vmem:[%s3] sm:$0x3]
          %v646 = vperm.slane %v644, 0
          %v647 = vperm.slane %v644, 1
          %v650 = vmul.f32 %v642, %v646
          %v651 = vmul.f32 %v643, %v647
          %v652 = vld [vmem:[#allocation9] sm:$0x3]
          %v654 = vperm.slane %v652, 0
          %v655 = vperm.slane %v652, 1
          %v658 = vadd.f32 %v650, %v654
          %v659 = vadd.f32 %v651, %v655
          %v660 = vld [vmem:[#allocation6] sm:$0xff]
          %v661 = vld [vmem:[#allocation6 + $0x8] sm:$0xff]
          %v662 = vld [vmem:[#allocation6 + $0x10] sm:$0xff]
          %v663 = vld [vmem:[#allocation6 + $0x18] sm:$0xff]
          %v664 = vld [vmem:[#allocation6 + $0x20] sm:$0xff]
          %v665 = vld [vmem:[#allocation6 + $0x28] sm:$0xff]
          %v666 = vld [vmem:[#allocation6 + $0x30] sm:$0xff]
          %v667 = vld [vmem:[#allocation6 + $0x38] sm:$0xff]
          %v668 = vld [vmem:[#allocation6 + $0x40] sm:$0xff]
          %v669 = vld [vmem:[#allocation6 + $0x48] sm:$0xff]
          %v670 = vld [vmem:[#allocation6 + $0x50] sm:$0xff]
          %v671 = vld [vmem:[#allocation6 + $0x58] sm:$0xff]
          %v672 = vld [vmem:[#allocation6 + $0x60] sm:$0xff]
          %v673 = vld [vmem:[#allocation6 + $0x68] sm:$0xff]
          %v674 = vld [vmem:[#allocation6 + $0x70] sm:$0xff]
          %v675 = vld [vmem:[#allocation6 + $0x78] sm:$0xff]
          %v676 = vld [vmem:[#allocation6 + $0x80] sm:$0xff]
          %v677 = vld [vmem:[#allocation6 + $0x88] sm:$0xff]
          %v678 = vld [vmem:[#allocation6 + $0x90] sm:$0xff]
          %v679 = vld [vmem:[#allocation6 + $0x98] sm:$0xff]
          %v680 = vld [vmem:[#allocation6 + $0xa0] sm:$0xff]
          %v681 = vld [vmem:[#allocation6 + $0xa8] sm:$0xff]
          %v682 = vld [vmem:[#allocation6 + $0xb0] sm:$0xff]
          %v683 = vld [vmem:[#allocation6 + $0xb8] sm:$0xff]
          %v684 = vld [vmem:[#allocation6 + $0xc0] sm:$0xff]
          %v685 = vld [vmem:[#allocation6 + $0xc8] sm:$0xff]
          %v686 = vld [vmem:[#allocation6 + $0xd0] sm:$0xff]
          %v687 = vld [vmem:[#allocation6 + $0xd8] sm:$0xff]
          %v688 = vld [vmem:[#allocation6 + $0xe0] sm:$0xff]
          %v689 = vld [vmem:[#allocation6 + $0xe8] sm:$0xff]
          %v690 = vld [vmem:[#allocation6 + $0xf0] sm:$0xff]
          %v691 = vld [vmem:[#allocation6 + $0xf8] sm:$0xff]
          %v692 = vld [vmem:[#allocation8] sm:$0x1]
          %v694 = vperm.slane %v692, 0
          %696 = vmatpush.msra.mxu0 %v675
          %697 = vmatpush.msra.mxu0 %v674
          %698 = vmatpush.msra.mxu0 %v673
          %699 = vmatpush.msra.mxu0 %v672
          %700 = vmatpush.msra.mxu0 %v671
          %701 = vmatpush.msra.mxu0 %v670
          %702 = vmatpush.msra.mxu0 %v669
          %703 = vmatpush.msra.mxu0 %v668
          %704 = vmatpush.msra.mxu0 %v667
          %705 = vmatpush.msra.mxu0 %v666
          %706 = vmatpush.msra.mxu0 %v665
          %707 = vmatpush.msra.mxu0 %v664
          %708 = vmatpush.msra.mxu0 %v663
          %709 = vmatpush.msra.mxu0 %v662
          %710 = vmatpush.msra.mxu0 %v661
          %711 = vmatpush.msra.mxu0 %v660
          %712 = vmatmul.f32.gmra.mxu0 %v658
          %v713 = vpop.f32.mrf.mxu0
          %v714 = vadd.f32 %v694, %v713
          %715 = vdwg.mxu0
          %716 = vmatpush.msra.mxu0 %v691
          %717 = vmatpush.msra.mxu0 %v690
          %718 = vmatpush.msra.mxu0 %v689
          %719 = vmatpush.msra.mxu0 %v688
          %720 = vmatpush.msra.mxu0 %v687
          %721 = vmatpush.msra.mxu0 %v686
          %722 = vmatpush.msra.mxu0 %v685
          %723 = vmatpush.msra.mxu0 %v684
          %724 = vmatpush.msra.mxu0 %v683
          %725 = vmatpush.msra.mxu0 %v682
          %726 = vmatpush.msra.mxu0 %v681
          %727 = vmatpush.msra.mxu0 %v680
          %728 = vmatpush.msra.mxu0 %v679
          %729 = vmatpush.msra.mxu0 %v678
          %730 = vmatpush.msra.mxu0 %v677
          %731 = vmatpush.msra.mxu0 %v676
          %732 = vmatmul.f32.gmra.mxu0 %v659
          %v733 = vpop.f32.mrf.mxu0
          %v734 = vadd.f32 %v714, %v733
          %735 = vdwg.mxu0
          %v736 = vrot.slane %v734, 4
          %v737 = vadd.f32 %v734, %v736
          %v738 = vrot.slane %v737, 2
          %v739 = vadd.f32 %v737, %v738
          %v740 = vrot.slane %v739, 1
          %v741 = vadd.f32 %v739, %v740
          %v742 = vmul.f32 %v741, %v599
          %v743 = vsub.f32 %v734, %v742
          %v744 = vmul.f32 %v743, %v743
          %v745 = vrot.slane %v744, 4
          %v746 = vadd.f32 %v744, %v745
          %v747 = vrot.slane %v746, 2
          %v748 = vadd.f32 %v746, %v747
          %v749 = vrot.slane %v748, 1
          %v750 = vadd.f32 %v748, %v749
          %v751 = vmul.f32 %v750, %v599
          %v752 = vadd.f32 %v751, 1e-05
          %v753 = vrsqrt.pop %v752
          %v754 = vmul.f32 %v753, %v752
          %v755 = vmul.f32 %v754, %v753
          %v756 = vmul.f32 0.5, %v755
          %v757 = vsub.f32 1.5, %v756
          %v758 = vmul.f32 %v753, %v757
          %vm759 = vweird.f32 %v752
          %vm760 = vweird.f32 %v753
          %vm761 = vmor %vm759, %vm760
          %v762 = vsel %vm761, %v753, %v758
          %v763 = vmul.f32 %v743, %v762
          %v764 = vld [vmem:[%s5] sm:$0x1]
          %v766 = vperm.slane %v764, 0
          %v768 = vmul.f32 %v763, %v766
          %v769 = vld [vmem:[%s6] sm:$0x1]
          %v771 = vperm.slane %v769, 0
          %v773 = vadd.f32 %v768, %v771
          %v774 = vmul.f32 %v773, %v773
          %775 = vadd.xlane.f32.xlu0 %v774
          %v776 = vpop.xlane.xlu0 %775
          %v777 = vmax.f32 %v776, 1e-24
          %v778 = vrsqrt.pop %v777
          %v779 = vmul.f32 %v778, %v777
          %v780 = vmul.f32 %v779, %v778
          %v781 = vmul.f32 0.5, %v780
          %v782 = vsub.f32 1.5, %v781
          %v783 = vmul.f32 %v778, %v782
          %vm784 = vweird.f32 %v777
          %vm785 = vweird.f32 %v778
          %vm786 = vmor %vm784, %vm785
          %v787 = vsel %vm786, %v778, %v783
          %v788 = vmul.f32 %v773, %v787
          %v789 = vld [vmem:[#allocation11] sm:$0xff]
          %v790 = vmul.f32 %v788, %v789
          %v791 = vmul.f32 %v790, 2.0
          %792 = vst [vmem:[#allocation13] sm:$0xff] %v791
        $region80: #{memory_bank_forward.1} parent=51 // pred_fallthru
          _
        // Predicated region
        $region81: #{memory_bank_forward.1} parent=51 // pred_check
          %p793 = pneg %p214
        $region82: #{memory_bank_forward.1} parent=51 // pred_check_branch
          %795 = sbr.rel (%p793) target = $region84
        $region83: #{memory_bank_forward.1} parent=51 // pred_region
          %797 = vsyncadd [#allocation5], 0
          %s799 = sshll.u32 [#allocation12], 4
          %s800 = int_to_ptr.vmem [resolvable:$true] %s799
          %s801 = sshll.u32 %s8, 4
          %s802 = int_to_ptr.hbm [resolvable:$true] %s801
          %804 = dma.vmem_to_hbm [thread:$0]  %s800, 256, %s802, [#allocation5]
        $region84: #{memory_bank_forward.1} parent=51 // pred_fallthru
          _
        // Predicated region
        $region85: #{memory_bank_forward.1} parent=51 // pred_check
          %p805 = pneg %p235
        $region86: #{memory_bank_forward.1} parent=51 // pred_check_branch
          %807 = sbr.rel (%p805) target = $region88
        $region87: #{memory_bank_forward.1} parent=51 // pred_region
          %809 = vsyncadd [#allocation14], 0
          %s811 = sshll.u32 [#allocation13], 4
          %s812 = int_to_ptr.vmem [resolvable:$true] %s811
          %s813 = sshll.u32 %s9, 4
          %s814 = int_to_ptr.hbm [resolvable:$true] %s813
          %816 = dma.vmem_to_hbm [thread:$0]  %s812, 128, %s814, [#allocation14]
        $region88: #{memory_bank_forward.1} parent=51 // pred_fallthru
          _
        // Predicated region
        $region89: #{memory_bank_forward.1} parent=51 // pred_check
          %p817 = pneg %p214
        $region90: #{memory_bank_forward.1} parent=51 // pred_check_branch
          %819 = sbr.rel (%p817) target = $region92
        $region91: #{memory_bank_forward.1} parent=51 // pred_region
          %821 = dma.done [#allocation5], 256
        $region92: #{memory_bank_forward.1} parent=51 // pred_fallthru
          _
        // Predicated region
        $region93: #{memory_bank_forward.1} parent=51 // pred_check
          %p822 = pneg %p235
        $region94: #{memory_bank_forward.1} parent=51 // pred_check_branch
          %824 = sbr.rel (%p822) target = $region96
        $region95: #{memory_bank_forward.1} parent=51 // pred_region
          %826 = dma.done [#allocation14], 128
        $region96: #{memory_bank_forward.1} parent=51 // pred_fallthru
          _
      $region52: #{memory_bank_forward.1} parent=5 // pred_fallthru
        _
      %p827 = scmp.le.s32.totalorder 2, %s23
      // Predicated region
      $region97: #{memory_bank_forward.1} parent=5 // pred_check
        %p828 = pneg %p827
      $region98: #{memory_bank_forward.1} parent=5 // pred_check_branch
        %830 = sbr.rel (%p828) target = $region100
      $region99: #{memory_bank_forward.1} parent=5 // pred_region
        %s831 = ssub.s32 %s23, 2
      $region100: #{memory_bank_forward.1} parent=5 // pred_fallthru
        _
    $region6: #{memory_bank_forward.1} parent=1 // loop_footer
      %s27 = sadd.s32 1, %s23
    $region7: #{memory_bank_forward.1} parent=1 // loop_footer_branch
      %22 = sbr.rel target = $region3
    $region8: #{memory_bank_forward.1} parent=1 // loop_exit
      _
    %832 = vsyncpa [#allocation4], 1
    %s833 = scalar_lea.sflag [#allocation4], 1
    %834 = vsyncpa %s833, 1
    %835 = vsyncpa [#allocation7], 1
    %836 = vsyncpa [#allocation10], 1
    %837 = vsyncpa [#allocation5], 1
    %s838 = scalar_lea.sflag [#allocation5], 1
    %839 = vsyncpa %s838, 1
    %840 = vsyncpa [#allocation14], 1

</llo_original>
